<compile_context>
chip_gen: v7x
topology: tpu7x:2x2x1
jax: 0.10.0
libtpu: 0.0.40
codegen_flags: <defaults>
</compile_context>

<pallas_src>
import functools

import jax
import jax.numpy as jnp
from jax.experimental import pallas as pl
from jax.experimental.pallas import tpu as pltpu


# -----------------------------------------------------------------------------
# Kernel body: h_swish(x) = x * relu6(x + 3) / 6
# -----------------------------------------------------------------------------
def _h_swish_kernel(x_ref, o_ref, *, compute_dtype):
    x = x_ref[...].astype(compute_dtype)
    hs = jnp.clip(x + 3.0, 0.0, 6.0) * (1.0 / 6.0)   # h_sigmoid
    o_ref[...] = (x * hs).astype(o_ref.dtype)


# -----------------------------------------------------------------------------
# Trace-time generation detection & per-generation tuning.
# -----------------------------------------------------------------------------
def _tpu_generation():
    try:
        kind = jax.devices()[0].device_kind.lower()
    except Exception:
        return "unknown"
    if "v5 lite" in kind or "v5lite" in kind or "v5e" in kind:
        return "v5e"
    if "v6" in kind:
        return "v6e"
    if "v7" in kind or "tpu7" in kind:
        return "v7x"
    return "unknown"


# generation -> (target block bytes, vmem_limit_bytes, shard grid across TCs)
# VMEM budget per step: 3 input buffers (Buffered(3)) + 2 output buffers = 5 blocks.
_GEN_CONFIG = {
    "v5e": (4 * 1024 * 1024, 32 * 1024 * 1024, False),   # 20 MiB used, 128 MiB phys
    "v6e": (8 * 1024 * 1024, 64 * 1024 * 1024, False),   # 40 MiB used, 128 MiB phys
    "v7x": (6 * 1024 * 1024, 48 * 1024 * 1024, True),    # 30 MiB used,  64 MiB phys
    "unknown": (2 * 1024 * 1024, None, False),           # conservative defaults
}

_LANE_CANDIDATES = (8192, 4096, 2048, 1024, 512, 256, 128)


def _choose_layout(n, itemsize, target_block_bytes):
    """Static (trace-time) choice of (lane_width, tile_rows).

    Returns None when no copy-free 2D factorization with a lane-dense
    (multiple-of-128) last dim exists -> caller uses the fused-jnp fallback.
    """
    row_gran = max(8, 32 // itemsize)   # native packed sublane tile per dtype
    lane_width = None
    for w in _LANE_CANDIDATES:
        if n % w == 0:
            lane_width = w
            break
    if lane_width is None:
        return None
    rows = n // lane_width

    # Rows per block so one block is ~target_block_bytes (rounded to row_gran).
    max_rows = max(row_gran,
                   (target_block_bytes // (lane_width * itemsize))
                   // row_gran * row_gran)

    if rows <= max_rows:
        # Whole slab fits in one block.  Split into 4 or 2 exact,
        # (row_gran,128)-aligned grid steps when that's free so the grid can be
        # sharded across both v7x TensorCores (harmless on 1-TC chips).
        if (rows % (4 * row_gran) == 0
                and (rows // 4) * lane_width * itemsize >= 512 * 1024):
            return lane_width, rows // 4
        if rows % (2 * row_gran) == 0:
            return lane_width, rows // 2
        return lane_width, rows   # block_shape == full array dims: always legal

    # Largest multiple-of-row_gran divisor of rows within the budget
    # (exact grid, no partial edge block) ...
    for d in range(max_rows, row_gran - 1, -row_gran):
        if rows % d == 0:
            return lane_width, d
    # ... otherwise full-size blocks with a single masked ragged edge block.
    return lane_width, max_rows


def _h_swish_jnp(x):
    xf = x.astype(jnp.float32)
    return (xf * (jnp.clip(xf + 3.0, 0.0, 6.0) * (1.0 / 6.0))).astype(x.dtype)


# -----------------------------------------------------------------------------
# Public wrapper.
# -----------------------------------------------------------------------------
@functools.partial(jax.jit, static_argnames=("donate",))
def h_swish(x, donate=False):
    """Elementwise h_swish on an arbitrary-shape array via a Pallas kernel.

    Set donate=True only when the input is dead afterwards; it aliases the
    input and output HBM buffers via input_output_aliases (ignored on the
    rare fused-jnp fallback path for non-factorable element counts).
    """
    orig_shape = x.shape
    orig_dtype = x.dtype
    n = x.size
    if n == 0:
        return x
    itemsize = jnp.dtype(orig_dtype).itemsize

    gen = _tpu_generation()
    target_block_bytes, vmem_limit, core_parallel = _GEN_CONFIG[gen]

    layout = _choose_layout(n, itemsize, target_block_bytes)
    if layout is None:
        # No copy-free lane-dense factorization: a pad->kernel->slice round trip
        # would add two full HBM passes to a bandwidth-bound op, so let XLA's
        # fused elementwise handle these (rare) sizes instead.
        return _h_swish_jnp(x)

    lane_width, tile_rows = layout
    rows = n // lane_width
    grid = (pl.cdiv(rows, tile_rows),)

    # bf16 has a native VALU on v6e/v7x; elsewhere (and for other dtypes)
    # compute in f32 (exact for f32 inputs, better numerics for halfs on v5e).
    if orig_dtype == jnp.bfloat16 and gen in ("v6e", "v7x"):
        compute_dtype = jnp.bfloat16
    else:
        compute_dtype = jnp.float32
    kernel = functools.partial(_h_swish_kernel, compute_dtype=compute_dtype)

    # Lane-dense 2D slab; contiguous reshape is layout plumbing under jit.
    x2d = x.reshape(rows, lane_width)

    block_shape = (tile_rows, lane_width)
    if grid[0] >= 3:
        # Near-zero compute per block: keep two input DMAs in flight to hide
        # descriptor-issue latency between blocks.
        in_spec = pl.BlockSpec(block_shape, lambda i: (i, 0),
                               pipeline_mode=pl.Buffered(3))
    else:
        in_spec = pl.BlockSpec(block_shape, lambda i: (i, 0))
    out_spec = pl.BlockSpec(block_shape, lambda i: (i, 0))

    if core_parallel and grid[0] >= 2 and hasattr(pltpu, "CORE_PARALLEL"):
        dims = (pltpu.CORE_PARALLEL,)        # actually engage both v7x TCs
    else:
        dims = ("parallel",)

    compiler_kwargs = dict(dimension_semantics=dims)
    if vmem_limit is not None:
        compiler_kwargs["vmem_limit_bytes"] = vmem_limit

    out2d = pl.pallas_call(
        kernel,
        out_shape=jax.ShapeDtypeStruct((rows, lane_width), orig_dtype),
        grid_spec=pltpu.PrefetchScalarGridSpec(
            num_scalar_prefetch=0,
            grid=grid,
            in_specs=[in_spec],
            out_specs=out_spec,
        ),
        compiler_params=pltpu.CompilerParams(**compiler_kwargs),
        cost_estimate=pl.CostEstimate(
            flops=5 * n,                      # add, max, min, 2 muls / element
            transcendentals=0,
            bytes_accessed=2 * n * itemsize,
        ),
        input_output_aliases=({0: 0} if donate else {}),
    )(x2d)

    return out2d.reshape(orig_shape)


def h_swish_ref(x):
    return x * (jnp.clip(x + 3.0, 0.0, 6.0) / 6.0)


if __name__ == "__main__":
    key = jax.random.PRNGKey(0)

    # NCHW, matching PyTorch conv-layer activations.
    x = jax.random.normal(key, (2, 4, 16, 16), dtype=jnp.float32) * 4.0
    out = h_swish(x)
    jax.block_until_ready(out)
    ref = h_swish_ref(x)
    assert out.shape == x.shape and out.dtype == x.dtype
    assert jnp.allclose(out, ref, atol=1e-6, rtol=1e-6)

    # Odd element count exercises the copy-free fallback path (fused jnp).
    x_odd = jax.random.normal(jax.random.PRNGKey(0), (3, 5, 7), dtype=jnp.float32)
    out_odd = h_swish(x_odd)
    jax.block_until_ready(out_odd)
    assert jnp.allclose(out_odd, h_swish_ref(x_odd), atol=1e-6, rtol=1e-6)

    print("KERNEL_OK")
</pallas_src>

<mosaic_0001>
module attributes {stable_mosaic.version = 11 : i64} {
  func.func @_h_swish_kernel(%arg0: i32, %arg1: memref<1x2048xf32, #tpu.memory_space<vmem>>, %arg2: memref<1x2048xf32, #tpu.memory_space<vmem>>) attributes {dimension_semantics = [#tpu.dimension_semantics<parallel>], iteration_bounds = array<i64: 1>, scalar_prefetch = 0 : i64, scratch_operands = 0 : i64, tpu.core_type = #tpu.core_type<tc>, window_params = [{transform_indices = @transform_0, window_bounds = array<i64: 1, 2048>}, {transform_indices = @transform_1, window_bounds = array<i64: 1, 2048>}]} {
    %c0 = arith.constant 0 : index
    %c0_0 = arith.constant 0 : index
    %0 = vector.load %arg1[%c0, %c0_0] : memref<1x2048xf32, #tpu.memory_space<vmem>>, vector<1x2048xf32>
    %cst = arith.constant 3.000000e+00 : f32
    %1 = vector.broadcast %cst : f32 to vector<1x2048xf32>
    %2 = arith.addf %0, %1 : vector<1x2048xf32>
    %cst_1 = arith.constant 0.000000e+00 : f32
    %cst_2 = arith.constant 6.000000e+00 : f32
    %3 = vector.broadcast %cst_1 : f32 to vector<1x2048xf32>
    %4 = arith.maximumf %3, %2 : vector<1x2048xf32>
    %5 = vector.broadcast %cst_2 : f32 to vector<1x2048xf32>
    %6 = arith.minimumf %5, %4 : vector<1x2048xf32>
    %cst_3 = arith.constant 0.166666672 : f32
    %7 = vector.broadcast %cst_3 : f32 to vector<1x2048xf32>
    %8 = arith.mulf %6, %7 : vector<1x2048xf32>
    %9 = arith.mulf %0, %8 : vector<1x2048xf32>
    %c0_4 = arith.constant 0 : index
    %c0_5 = arith.constant 0 : index
    %10 = vector.load %arg2[%c0_4, %c0_5] : memref<1x2048xf32, #tpu.memory_space<vmem>>, vector<1x2048xf32>
    tpu.vector_store %arg2[%c0_4, %c0_5], %9 {strides = array<i32>} : memref<1x2048xf32, #tpu.memory_space<vmem>>, vector<1x2048xf32>,
    return
  }
  func.func @transform_0(%arg0: i32) -> (i32, i32) {
    %c0_i32 = arith.constant 0 : i32
    %c0_i32_0 = arith.constant 0 : i32
    return %arg0, %c0_i32 : i32, i32
  }
  func.func @transform_1(%arg0: i32) -> (i32, i32) {
    %c0_i32 = arith.constant 0 : i32
    %c0_i32_0 = arith.constant 0 : i32
    return %arg0, %c0_i32 : i32, i32
  }
}

</mosaic_0001>

<llo_original>
// kernel: h_swish.1
$region0: #{h_swish.1}
  #allocation0 [shape = 'u32[]', space=smem, size = 0x4, offset = 0x4, fixed_abs, tag = 'smem constant byte address 0x4 - core index']
  #allocation1 [shape = 'u32[144,128]{1,0:T(1,128)}', space=vmem, size = 0x12000, scoped, tag = 'internal scratch']
  %s0 = inlined_call_operand.vmem [shape: f32[1,2048], index: 0, kind: input, shape index: {}]
  %s1 = inlined_call_operand.vmem [shape: f32[1,2048], index: 1, kind: output, shape index: {}]
  %s2 = sld [smem:[#allocation0]]
  $region14: #{h_swish.1} parent=0
    _
  %s4 = ssub.s32 1, %s2
  %s5 = scalar_select 0, %s4, %s2
  // Predicated region
  $region2: #{h_swish.1} parent=0 // pred_check
    _
  $region3: #{h_swish.1} parent=0 // pred_check_branch
    %7 = sbr.rel (0) target = $region5
  $region4: #{h_swish.1} parent=0 // pred_region
    _
  $region5: #{h_swish.1} parent=0 // pred_fallthru
    _
  %v8 = vld [vmem:[%s0] sm:$0xff]
  %v9 = vld [vmem:[%s0 + $0x8] sm:$0xff]
  %v10 = vadd.f32 %v8, 3.0
  %v11 = vadd.f32 %v9, 3.0
  %v12 = vmax.f32 %v10, 0.0
  %v13 = vmax.f32 %v11, 0.0
  %v14 = vmin.f32 %v12, 6.0
  %v15 = vmin.f32 %v13, 6.0
  %v16 = vmul.f32 %v14, 0.16666667
  %v17 = vmul.f32 %v15, 0.16666667
  %v18 = vmul.f32 %v8, %v16
  %v19 = vmul.f32 %v9, %v17
  %20 = vst [vmem:[%s1] sm:$0xff] %v18
  %21 = vst [vmem:[%s1 + $0x8] sm:$0xff] %v19
  // Predicated region
  $region6: #{h_swish.1} parent=0 // pred_check
    _
  $region7: #{h_swish.1} parent=0 // pred_check_branch
    %23 = sbr.rel (0) target = $region9
  $region8: #{h_swish.1} parent=0 // pred_region
    _
  $region9: #{h_swish.1} parent=0 // pred_fallthru
    _
  // Predicated region
  $region10: #{h_swish.1} parent=0 // pred_check
    _
  $region11: #{h_swish.1} parent=0 // pred_check_branch
    %25 = sbr.rel (0) target = $region13
  $region12: #{h_swish.1} parent=0 // pred_region
    _
  $region13: #{h_swish.1} parent=0 // pred_fallthru
    _

</llo_original>
